<compile_context>
chip_gen: v5e
topology: v5e:2x2
jax: 0.10.0
libtpu: 0.0.40
codegen_flags: <defaults>
</compile_context>

<pallas_src>
import functools

import jax
import jax.numpy as jnp
from jax.experimental import pallas as pl
from jax.experimental.pallas import tpu as pltpu

LN_EPS = 1e-5  # torch.nn.LayerNorm default


def _round_up(x, m):
    return ((x + m - 1) // m) * m


def _relu_ln(z, gamma, beta):
    """ReLU -> LayerNorm with one-pass statistics; all math in f32."""
    a = jnp.maximum(z, 0.0)
    inv_f = 1.0 / a.shape[-1]
    s = jnp.sum(a, axis=-1, keepdims=True)        # XLU reduce #1
    s2 = jnp.sum(a * a, axis=-1, keepdims=True)   # XLU reduce #2 (independent)
    mu = s * inv_f
    var = jnp.maximum(s2 * inv_f - mu * mu, 0.0)  # guard tiny negative
    inv_std = jax.lax.rsqrt(var + LN_EPS)         # EUP
    return (a - mu) * inv_std * gamma + beta


def c_mlp_kernel(x_ref, a_ref,
                 w1x_ref, w1a_ref, b1_ref, g1_ref, be1_ref,
                 w2_ref, b2_ref, g2_ref, be2_ref,
                 w3_ref, b3_ref, g3_ref, be3_ref,
                 o_ref):
    # Read per-layer affine params once into locals (vreg hygiene).
    b1, g1, be1 = b1_ref[...], g1_ref[...], be1_ref[...]
    b2, g2, be2 = b2_ref[...], g2_ref[...], be2_ref[...]
    b3, g3, be3 = b3_ref[...], g3_ref[...], be3_ref[...]

    # fc1: concat([x, actions]) @ W1 fused as a split matmul.
    z1 = (jnp.dot(x_ref[...], w1x_ref[...], preferred_element_type=jnp.float32)
          + jnp.dot(a_ref[...], w1a_ref[...], preferred_element_type=jnp.float32)
          + b1)
    h1 = _relu_ln(z1, g1, be1)

    # fc2
    z2 = jnp.dot(h1.astype(w2_ref.dtype), w2_ref[...],
                 preferred_element_type=jnp.float32) + b2
    h2 = _relu_ln(z2, g2, be2)

    # fc3
    z3 = jnp.dot(h2.astype(w3_ref.dtype), w3_ref[...],
                 preferred_element_type=jnp.float32) + b3
    h3 = _relu_ln(z3, g3, be3)

    # TODO(synk): 32-lane-wide store is masked (vst.msk); a lane-dense (.., 128)
    # output slab would need an in-kernel relayout — secondary win, skipped.
    o_ref[...] = h3.astype(o_ref.dtype)


@functools.partial(jax.jit, static_argnames=("use_centralized_V",))
def c_mlp_forward(x, actions, params, use_centralized_V=True):
    B, len_x = x.shape
    N = len_x // 24

    if use_centralized_V:
        # actions: (B, 2) -> (B//N, 2N) -> repeat per agent -> (B, 2N)
        a = actions.reshape(B // N, -1)
        a = jnp.repeat(a[:, None, :], N, axis=1)
        actions = a.reshape(B, -1)
    a_dim = actions.shape[1]
    d0 = len_x + a_dim

    (w1, b1, g1, be1, w2, b2, g2, be2, w3, b3, g3, be3) = params

    # bf16 matmul inputs, f32 accumulate (LN/affine params stay f32).
    w1x = w1[:len_x].astype(jnp.bfloat16)
    w1a = w1[len_x:].astype(jnp.bfloat16)
    w2b = w2.astype(jnp.bfloat16)
    w3b = w3.astype(jnp.bfloat16)
    x_in = x.astype(jnp.bfloat16)
    a_in = actions.astype(jnp.bfloat16)

    # Batch tiling: multiple of 8 (f32 sublane), capped at 1024 rows per tile.
    tile_b = min(1024, _round_up(B, 8))
    b_pad = _round_up(B, tile_b)
    if b_pad != B:
        pad = b_pad - B
        x_in = jnp.pad(x_in, ((0, pad), (0, 0)))
        a_in = jnp.pad(a_in, ((0, pad), (0, 0)))

    grid = (b_pad // tile_b,)

    def row_spec(cols):
        return pl.BlockSpec((tile_b, cols), lambda i: (i, 0))

    def const_spec(shape):
        return pl.BlockSpec(shape, lambda i: (0, 0))

    cost = pl.CostEstimate(
        flops=2 * b_pad * (d0 * 256 + 256 * 128 + 128 * 32),
        transcendentals=3 * b_pad,
        bytes_accessed=(b_pad * d0 * 2                      # bf16 activations in
                        + b_pad * 32 * 4                    # f32 output
                        + (d0 * 256 + 256 * 128 + 128 * 32) * 2   # bf16 weights
                        + (256 + 128 + 32) * 3 * 4),        # f32 bias/gamma/beta
    )

    out = pl.pallas_call(
        c_mlp_kernel,
        grid=grid,
        out_shape=jax.ShapeDtypeStruct((b_pad, 32), jnp.float32),
        in_specs=[
            row_spec(len_x),                  # x tile
            row_spec(a_dim),                  # actions tile
            const_spec((len_x, 256)),         # w1 (x half)
            const_spec((a_dim, 256)),         # w1 (action half)
            const_spec((1, 256)), const_spec((1, 256)), const_spec((1, 256)),
            const_spec((256, 128)),           # w2
            const_spec((1, 128)), const_spec((1, 128)), const_spec((1, 128)),
            const_spec((128, 32)),            # w3
            const_spec((1, 32)), const_spec((1, 32)), const_spec((1, 32)),
        ],
        out_specs=row_spec(32),
        compiler_params=pltpu.CompilerParams(
            dimension_semantics=("parallel",)),
        cost_estimate=cost,
    )(x_in, a_in,
      w1x, w1a, b1, g1, be1,
      w2b, b2, g2, be2,
      w3b, b3, g3, be3)

    return out[:B]


def make_params(key, input_dim, use_centralized_V=True):
    """Orthogonal weights (gain=sqrt(2) for ReLU), zero biases,
    LayerNorm weight=1, bias=0 (torch defaults)."""
    N = input_dim // 24
    action_dim = 2 * N if use_centralized_V else 2
    d0 = input_dim + action_dim
    dims = [(d0, 256), (256, 128), (128, 32)]
    gain = jnp.sqrt(2.0)

    orth = jax.nn.initializers.orthogonal()
    keys = jax.random.split(key, len(dims))
    params = []
    for k, (din, dout) in zip(keys, dims):
        w = gain * orth(k, (din, dout), jnp.float32)   # Linear weight (in, out)
        b = jnp.zeros((1, dout), jnp.float32)          # Linear bias = 0
        g = jnp.ones((1, dout), jnp.float32)           # LayerNorm weight = 1
        be = jnp.zeros((1, dout), jnp.float32)         # LayerNorm bias = 0
        params += [w, b, g, be]
    return tuple(params)


def _reference_forward(x, actions, params, use_centralized_V=True):
    """Pure-JAX f32 reference of the PyTorch module."""
    B, len_x = x.shape
    N = len_x // 24
    if use_centralized_V:
        a = actions.reshape(B // N, -1)
        a = jnp.repeat(a[:, None, :], N, axis=1)
        actions = a.reshape(B, -1)
    h = jnp.concatenate([x, actions], axis=1)
    (w1, b1, g1, be1, w2, b2, g2, be2, w3, b3, g3, be3) = params
    for (w, b, g, be) in ((w1, b1, g1, be1), (w2, b2, g2, be2), (w3, b3, g3, be3)):
        z = h @ w + b
        a_ = jnp.maximum(z, 0.0)
        mu = jnp.mean(a_, axis=-1, keepdims=True)
        var = jnp.mean((a_ - mu) ** 2, axis=-1, keepdims=True)
        h = (a_ - mu) * jax.lax.rsqrt(var + LN_EPS) * g + be
    return h


if __name__ == "__main__":
    key = jax.random.PRNGKey(0)
    k_x, k_a, k_p = jax.random.split(key, 3)

    # N = 2 agents, input_dim = 24*N = 48, 4 rollouts * N agents = batch 8,
    # per-agent action dim 2.
    N = 2
    input_dim = 24 * N
    B = 4 * N

    x = jax.random.normal(k_x, (B, input_dim), jnp.float32)
    actions = jax.random.normal(k_a, (B, 2), jnp.float32)
    params = make_params(k_p, input_dim, use_centralized_V=True)

    out = c_mlp_forward(x, actions, params, use_centralized_V=True)
    out = jax.block_until_ready(out)
    assert out.shape == (B, 32), out.shape

    ref = _reference_forward(x, actions, params, use_centralized_V=True)
    max_err = float(jnp.max(jnp.abs(out - ref)))
    assert max_err < 0.25, f"max abs error vs f32 reference: {max_err}"

    print("KERNEL_OK")
</pallas_src>

<mosaic_0001>
module attributes {stable_mosaic.version = 11 : i64} {
  func.func @c_mlp_kernel(%arg0: i32, %arg1: memref<8x48xbf16, #tpu.memory_space<vmem>>, %arg2: memref<8x4xbf16, #tpu.memory_space<vmem>>, %arg3: memref<48x256xbf16, #tpu.memory_space<vmem>>, %arg4: memref<4x256xbf16, #tpu.memory_space<vmem>>, %arg5: memref<1x256xf32, #tpu.memory_space<vmem>>, %arg6: memref<1x256xf32, #tpu.memory_space<vmem>>, %arg7: memref<1x256xf32, #tpu.memory_space<vmem>>, %arg8: memref<256x128xbf16, #tpu.memory_space<vmem>>, %arg9: memref<1x128xf32, #tpu.memory_space<vmem>>, %arg10: memref<1x128xf32, #tpu.memory_space<vmem>>, %arg11: memref<1x128xf32, #tpu.memory_space<vmem>>, %arg12: memref<128x32xbf16, #tpu.memory_space<vmem>>, %arg13: memref<1x32xf32, #tpu.memory_space<vmem>>, %arg14: memref<1x32xf32, #tpu.memory_space<vmem>>, %arg15: memref<1x32xf32, #tpu.memory_space<vmem>>, %arg16: memref<8x32xf32, #tpu.memory_space<vmem>>) attributes {dimension_semantics = [#tpu.dimension_semantics<parallel>], iteration_bounds = array<i64: 1>, scalar_prefetch = 0 : i64, scratch_operands = 0 : i64, tpu.core_type = #tpu.core_type<tc>, window_params = [{transform_indices = @transform_0, window_bounds = array<i64: 8, 48>}, {transform_indices = @transform_1, window_bounds = array<i64: 8, 4>}, {pipeline_mode = #tpu.pipeline_mode<synchronous>, transform_indices = @transform_2, window_bounds = array<i64: 48, 256>}, {pipeline_mode = #tpu.pipeline_mode<synchronous>, transform_indices = @transform_3, window_bounds = array<i64: 4, 256>}, {pipeline_mode = #tpu.pipeline_mode<synchronous>, transform_indices = @transform_4, window_bounds = array<i64: 1, 256>}, {pipeline_mode = #tpu.pipeline_mode<synchronous>, transform_indices = @transform_5, window_bounds = array<i64: 1, 256>}, {pipeline_mode = #tpu.pipeline_mode<synchronous>, transform_indices = @transform_6, window_bounds = array<i64: 1, 256>}, {pipeline_mode = #tpu.pipeline_mode<synchronous>, transform_indices = @transform_7, window_bounds = array<i64: 256, 128>}, {pipeline_mode = #tpu.pipeline_mode<synchronous>, transform_indices = @transform_8, window_bounds = array<i64: 1, 128>}, {pipeline_mode = #tpu.pipeline_mode<synchronous>, transform_indices = @transform_9, window_bounds = array<i64: 1, 128>}, {pipeline_mode = #tpu.pipeline_mode<synchronous>, transform_indices = @transform_10, window_bounds = array<i64: 1, 128>}, {pipeline_mode = #tpu.pipeline_mode<synchronous>, transform_indices = @transform_11, window_bounds = array<i64: 128, 32>}, {pipeline_mode = #tpu.pipeline_mode<synchronous>, transform_indices = @transform_12, window_bounds = array<i64: 1, 32>}, {pipeline_mode = #tpu.pipeline_mode<synchronous>, transform_indices = @transform_13, window_bounds = array<i64: 1, 32>}, {pipeline_mode = #tpu.pipeline_mode<synchronous>, transform_indices = @transform_14, window_bounds = array<i64: 1, 32>}, {transform_indices = @transform_15, window_bounds = array<i64: 8, 32>}]} {
    %c0 = arith.constant 0 : index
    %c0_0 = arith.constant 0 : index
    %0 = vector.load %arg5[%c0, %c0_0] : memref<1x256xf32, #tpu.memory_space<vmem>>, vector<1x256xf32>
    %c0_1 = arith.constant 0 : index
    %c0_2 = arith.constant 0 : index
    %1 = vector.load %arg6[%c0_1, %c0_2] : memref<1x256xf32, #tpu.memory_space<vmem>>, vector<1x256xf32>
    %c0_3 = arith.constant 0 : index
    %c0_4 = arith.constant 0 : index
    %2 = vector.load %arg7[%c0_3, %c0_4] : memref<1x256xf32, #tpu.memory_space<vmem>>, vector<1x256xf32>
    %c0_5 = arith.constant 0 : index
    %c0_6 = arith.constant 0 : index
    %3 = vector.load %arg9[%c0_5, %c0_6] : memref<1x128xf32, #tpu.memory_space<vmem>>, vector<1x128xf32>
    %c0_7 = arith.constant 0 : index
    %c0_8 = arith.constant 0 : index
    %4 = vector.load %arg10[%c0_7, %c0_8] : memref<1x128xf32, #tpu.memory_space<vmem>>, vector<1x128xf32>
    %c0_9 = arith.constant 0 : index
    %c0_10 = arith.constant 0 : index
    %5 = vector.load %arg11[%c0_9, %c0_10] : memref<1x128xf32, #tpu.memory_space<vmem>>, vector<1x128xf32>
    %c0_11 = arith.constant 0 : index
    %c0_12 = arith.constant 0 : index
    %6 = vector.load %arg13[%c0_11, %c0_12] : memref<1x32xf32, #tpu.memory_space<vmem>>, vector<1x32xf32>
    %c0_13 = arith.constant 0 : index
    %c0_14 = arith.constant 0 : index
    %7 = vector.load %arg14[%c0_13, %c0_14] : memref<1x32xf32, #tpu.memory_space<vmem>>, vector<1x32xf32>
    %c0_15 = arith.constant 0 : index
    %c0_16 = arith.constant 0 : index
    %8 = vector.load %arg15[%c0_15, %c0_16] : memref<1x32xf32, #tpu.memory_space<vmem>>, vector<1x32xf32>
    %c0_17 = arith.constant 0 : index
    %c0_18 = arith.constant 0 : index
    %9 = vector.load %arg1[%c0_17, %c0_18] : memref<8x48xbf16, #tpu.memory_space<vmem>>, vector<8x48xbf16>
    %c0_19 = arith.constant 0 : index
    %c0_20 = arith.constant 0 : index
    %10 = vector.load %arg3[%c0_19, %c0_20] : memref<48x256xbf16, #tpu.memory_space<vmem>>, vector<48x256xbf16>
    %cst = arith.constant dense<0.000000e+00> : vector<8x256xf32>
    %11 = tpu.matmul %9, %10, %cst {dimension_numbers = #tpu.dot_dimension_numbers<[1], [0], [0], [1], [0, 0, 1, 1], [], []>} : vector<8x48xbf16>, vector<48x256xbf16>, vector<8x256xf32> -> vector<8x256xf32>
    %c0_21 = arith.constant 0 : index
    %c0_22 = arith.constant 0 : index
    %12 = vector.load %arg2[%c0_21, %c0_22] : memref<8x4xbf16, #tpu.memory_space<vmem>>, vector<8x4xbf16>
    %c0_23 = arith.constant 0 : index
    %c0_24 = arith.constant 0 : index
    %13 = vector.load %arg4[%c0_23, %c0_24] : memref<4x256xbf16, #tpu.memory_space<vmem>>, vector<4x256xbf16>
    %cst_25 = arith.constant dense<0.000000e+00> : vector<8x256xf32>
    %14 = tpu.matmul %12, %13, %cst_25 {dimension_numbers = #tpu.dot_dimension_numbers<[1], [0], [0], [1], [0, 0, 1, 1], [], []>} : vector<8x4xbf16>, vector<4x256xbf16>, vector<8x256xf32> -> vector<8x256xf32>
    %15 = arith.addf %11, %14 : vector<8x256xf32>
    %16 = vector.broadcast %0 : vector<1x256xf32> to vector<8x256xf32>
    %17 = arith.addf %15, %16 : vector<8x256xf32>
    %cst_26 = arith.constant 0.000000e+00 : f32
    %18 = vector.broadcast %cst_26 : f32 to vector<8x256xf32>
    %19 = arith.maximumf %17, %18 : vector<8x256xf32>
    %cst_27 = arith.constant dense<0.000000e+00> : vector<8xf32>
    %20 = vector.multi_reduction <add>, %19, %cst_27 [1] : vector<8x256xf32> to vector<8xf32>
    %21 = vector.shape_cast %20 : vector<8xf32> to vector<8x1xf32>
    %22 = arith.mulf %19, %19 : vector<8x256xf32>
    %cst_28 = arith.constant dense<0.000000e+00> : vector<8xf32>
    %23 = vector.multi_reduction <add>, %22, %cst_28 [1] : vector<8x256xf32> to vector<8xf32>
    %24 = vector.shape_cast %23 : vector<8xf32> to vector<8x1xf32>
    %cst_29 = arith.constant 3.906250e-03 : f32
    %25 = vector.broadcast %cst_29 : f32 to vector<8x1xf32>
    %26 = arith.mulf %21, %25 : vector<8x1xf32>
    %cst_30 = arith.constant 3.906250e-03 : f32
    %27 = vector.broadcast %cst_30 : f32 to vector<8x1xf32>
    %28 = arith.mulf %24, %27 : vector<8x1xf32>
    %29 = arith.mulf %26, %26 : vector<8x1xf32>
    %30 = arith.subf %28, %29 : vector<8x1xf32>
    %cst_31 = arith.constant 0.000000e+00 : f32
    %31 = vector.broadcast %cst_31 : f32 to vector<8x1xf32>
    %32 = arith.maximumf %30, %31 : vector<8x1xf32>
    %cst_32 = arith.constant 9.99999974E-6 : f32
    %33 = vector.broadcast %cst_32 : f32 to vector<8x1xf32>
    %34 = arith.addf %32, %33 : vector<8x1xf32>
    %35 = math.rsqrt %34 : vector<8x1xf32>
    %36 = vector.broadcast %26 : vector<8x1xf32> to vector<8x256xf32>
    %37 = arith.subf %19, %36 : vector<8x256xf32>
    %38 = vector.broadcast %35 : vector<8x1xf32> to vector<8x256xf32>
    %39 = arith.mulf %37, %38 : vector<8x256xf32>
    %40 = vector.broadcast %1 : vector<1x256xf32> to vector<8x256xf32>
    %41 = arith.mulf %39, %40 : vector<8x256xf32>
    %42 = vector.broadcast %2 : vector<1x256xf32> to vector<8x256xf32>
    %43 = arith.addf %41, %42 : vector<8x256xf32>
    %44 = arith.truncf %43 : vector<8x256xf32> to vector<8x256xbf16>
    %c0_33 = arith.constant 0 : index
    %c0_34 = arith.constant 0 : index
    %45 = vector.load %arg8[%c0_33, %c0_34] : memref<256x128xbf16, #tpu.memory_space<vmem>>, vector<256x128xbf16>
    %cst_35 = arith.constant dense<0.000000e+00> : vector<8x128xf32>
    %46 = tpu.matmul %44, %45, %cst_35 {dimension_numbers = #tpu.dot_dimension_numbers<[1], [0], [0], [1], [0, 0, 1, 1], [], []>} : vector<8x256xbf16>, vector<256x128xbf16>, vector<8x128xf32> -> vector<8x128xf32>
    %47 = vector.broadcast %3 : vector<1x128xf32> to vector<8x128xf32>
    %48 = arith.addf %46, %47 : vector<8x128xf32>
    %cst_36 = arith.constant 0.000000e+00 : f32
    %49 = vector.broadcast %cst_36 : f32 to vector<8x128xf32>
    %50 = arith.maximumf %48, %49 : vector<8x128xf32>
    %cst_37 = arith.constant dense<0.000000e+00> : vector<8xf32>
    %51 = vector.multi_reduction <add>, %50, %cst_37 [1] : vector<8x128xf32> to vector<8xf32>
    %52 = vector.shape_cast %51 : vector<8xf32> to vector<8x1xf32>
    %53 = arith.mulf %50, %50 : vector<8x128xf32>
    %cst_38 = arith.constant dense<0.000000e+00> : vector<8xf32>
    %54 = vector.multi_reduction <add>, %53, %cst_38 [1] : vector<8x128xf32> to vector<8xf32>
    %55 = vector.shape_cast %54 : vector<8xf32> to vector<8x1xf32>
    %cst_39 = arith.constant 7.812500e-03 : f32
    %56 = vector.broadcast %cst_39 : f32 to vector<8x1xf32>
    %57 = arith.mulf %52, %56 : vector<8x1xf32>
    %cst_40 = arith.constant 7.812500e-03 : f32
    %58 = vector.broadcast %cst_40 : f32 to vector<8x1xf32>
    %59 = arith.mulf %55, %58 : vector<8x1xf32>
    %60 = arith.mulf %57, %57 : vector<8x1xf32>
    %61 = arith.subf %59, %60 : vector<8x1xf32>
    %cst_41 = arith.constant 0.000000e+00 : f32
    %62 = vector.broadcast %cst_41 : f32 to vector<8x1xf32>
    %63 = arith.maximumf %61, %62 : vector<8x1xf32>
    %cst_42 = arith.constant 9.99999974E-6 : f32
    %64 = vector.broadcast %cst_42 : f32 to vector<8x1xf32>
    %65 = arith.addf %63, %64 : vector<8x1xf32>
    %66 = math.rsqrt %65 : vector<8x1xf32>
    %67 = vector.broadcast %57 : vector<8x1xf32> to vector<8x128xf32>
    %68 = arith.subf %50, %67 : vector<8x128xf32>
    %69 = vector.broadcast %66 : vector<8x1xf32> to vector<8x128xf32>
    %70 = arith.mulf %68, %69 : vector<8x128xf32>
    %71 = vector.broadcast %4 : vector<1x128xf32> to vector<8x128xf32>
    %72 = arith.mulf %70, %71 : vector<8x128xf32>
    %73 = vector.broadcast %5 : vector<1x128xf32> to vector<8x128xf32>
    %74 = arith.addf %72, %73 : vector<8x128xf32>
    %75 = arith.truncf %74 : vector<8x128xf32> to vector<8x128xbf16>
    %c0_43 = arith.constant 0 : index
    %c0_44 = arith.constant 0 : index
    %76 = vector.load %arg12[%c0_43, %c0_44] : memref<128x32xbf16, #tpu.memory_space<vmem>>, vector<128x32xbf16>
    %cst_45 = arith.constant dense<0.000000e+00> : vector<8x32xf32>
    %77 = tpu.matmul %75, %76, %cst_45 {dimension_numbers = #tpu.dot_dimension_numbers<[1], [0], [0], [1], [0, 0, 1, 1], [], []>} : vector<8x128xbf16>, vector<128x32xbf16>, vector<8x32xf32> -> vector<8x32xf32>
    %78 = vector.broadcast %6 : vector<1x32xf32> to vector<8x32xf32>
    %79 = arith.addf %77, %78 : vector<8x32xf32>
    %cst_46 = arith.constant 0.000000e+00 : f32
    %80 = vector.broadcast %cst_46 : f32 to vector<8x32xf32>
    %81 = arith.maximumf %79, %80 : vector<8x32xf32>
    %cst_47 = arith.constant dense<0.000000e+00> : vector<8xf32>
    %82 = vector.multi_reduction <add>, %81, %cst_47 [1] : vector<8x32xf32> to vector<8xf32>
    %83 = vector.shape_cast %82 : vector<8xf32> to vector<8x1xf32>
    %84 = arith.mulf %81, %81 : vector<8x32xf32>
    %cst_48 = arith.constant dense<0.000000e+00> : vector<8xf32>
    %85 = vector.multi_reduction <add>, %84, %cst_48 [1] : vector<8x32xf32> to vector<8xf32>
    %86 = vector.shape_cast %85 : vector<8xf32> to vector<8x1xf32>
    %cst_49 = arith.constant 3.125000e-02 : f32
    %87 = vector.broadcast %cst_49 : f32 to vector<8x1xf32>
    %88 = arith.mulf %83, %87 : vector<8x1xf32>
    %cst_50 = arith.constant 3.125000e-02 : f32
    %89 = vector.broadcast %cst_50 : f32 to vector<8x1xf32>
    %90 = arith.mulf %86, %89 : vector<8x1xf32>
    %91 = arith.mulf %88, %88 : vector<8x1xf32>
    %92 = arith.subf %90, %91 : vector<8x1xf32>
    %cst_51 = arith.constant 0.000000e+00 : f32
    %93 = vector.broadcast %cst_51 : f32 to vector<8x1xf32>
    %94 = arith.maximumf %92, %93 : vector<8x1xf32>
    %cst_52 = arith.constant 9.99999974E-6 : f32
    %95 = vector.broadcast %cst_52 : f32 to vector<8x1xf32>
    %96 = arith.addf %94, %95 : vector<8x1xf32>
    %97 = math.rsqrt %96 : vector<8x1xf32>
    %98 = vector.broadcast %88 : vector<8x1xf32> to vector<8x32xf32>
    %99 = arith.subf %81, %98 : vector<8x32xf32>
    %100 = vector.broadcast %97 : vector<8x1xf32> to vector<8x32xf32>
    %101 = arith.mulf %99, %100 : vector<8x32xf32>
    %102 = vector.broadcast %7 : vector<1x32xf32> to vector<8x32xf32>
    %103 = arith.mulf %101, %102 : vector<8x32xf32>
    %104 = vector.broadcast %8 : vector<1x32xf32> to vector<8x32xf32>
    %105 = arith.addf %103, %104 : vector<8x32xf32>
    %c0_53 = arith.constant 0 : index
    %c0_54 = arith.constant 0 : index
    %106 = vector.load %arg16[%c0_53, %c0_54] : memref<8x32xf32, #tpu.memory_space<vmem>>, vector<8x32xf32>
    tpu.vector_store %arg16[%c0_53, %c0_54], %105 {strides = array<i32>} : memref<8x32xf32, #tpu.memory_space<vmem>>, vector<8x32xf32>,
    return
  }
  func.func @transform_0(%arg0: i32) -> (i32, i32) {
    %c0_i32 = arith.constant 0 : i32
    %c0_i32_0 = arith.constant 0 : i32
    return %arg0, %c0_i32 : i32, i32
  }
  func.func @transform_1(%arg0: i32) -> (i32, i32) {
    %c0_i32 = arith.constant 0 : i32
    %c0_i32_0 = arith.constant 0 : i32
    return %arg0, %c0_i32 : i32, i32
  }
  func.func @transform_2(%arg0: i32) -> (i32, i32) {
    %c0_i32 = arith.constant 0 : i32
    %c0_i32_0 = arith.constant 0 : i32
    %c0_i32_1 = arith.constant 0 : i32
    return %c0_i32, %c0_i32_0 : i32, i32
  }
  func.func @transform_3(%arg0: i32) -> (i32, i32) {
    %c0_i32 = arith.constant 0 : i32
    %c0_i32_0 = arith.constant 0 : i32
    %c0_i32_1 = arith.constant 0 : i32
    return %c0_i32, %c0_i32_0 : i32, i32
  }
  func.func @transform_4(%arg0: i32) -> (i32, i32) {
    %c0_i32 = arith.constant 0 : i32
    %c0_i32_0 = arith.constant 0 : i32
    %c0_i32_1 = arith.constant 0 : i32
    return %c0_i32, %c0_i32_0 : i32, i32
  }
  func.func @transform_5(%arg0: i32) -> (i32, i32) {
    %c0_i32 = arith.constant 0 : i32
    %c0_i32_0 = arith.constant 0 : i32
    %c0_i32_1 = arith.constant 0 : i32
    return %c0_i32, %c0_i32_0 : i32, i32
  }
  func.func @transform_6(%arg0: i32) -> (i32, i32) {
    %c0_i32 = arith.constant 0 : i32
    %c0_i32_0 = arith.constant 0 : i32
    %c0_i32_1 = arith.constant 0 : i32
    return %c0_i32, %c0_i32_0 : i32, i32
  }
  func.func @transform_7(%arg0: i32) -> (i32, i32) {
    %c0_i32 = arith.constant 0 : i32
    %c0_i32_0 = arith.constant 0 : i32
    %c0_i32_1 = arith.constant 0 : i32
    return %c0_i32, %c0_i32_0 : i32, i32
  }
  func.func @transform_8(%arg0: i32) -> (i32, i32) {
    %c0_i32 = arith.constant 0 : i32
    %c0_i32_0 = arith.constant 0 : i32
    %c0_i32_1 = arith.constant 0 : i32
    return %c0_i32, %c0_i32_0 : i32, i32
  }
  func.func @transform_9(%arg0: i32) -> (i32, i32) {
    %c0_i32 = arith.constant 0 : i32
    %c0_i32_0 = arith.constant 0 : i32
    %c0_i32_1 = arith.constant 0 : i32
    return %c0_i32, %c0_i32_0 : i32, i32
  }
  func.func @transform_10(%arg0: i32) -> (i32, i32) {
    %c0_i32 = arith.constant 0 : i32
    %c0_i32_0 = arith.constant 0 : i32
    %c0_i32_1 = arith.constant 0 : i32
    return %c0_i32, %c0_i32_0 : i32, i32
  }
  func.func @transform_11(%arg0: i32) -> (i32, i32) {
    %c0_i32 = arith.constant 0 : i32
    %c0_i32_0 = arith.constant 0 : i32
    %c0_i32_1 = arith.constant 0 : i32
    return %c0_i32, %c0_i32_0 : i32, i32
  }
  func.func @transform_12(%arg0: i32) -> (i32, i32) {
    %c0_i32 = arith.constant 0 : i32
    %c0_i32_0 = arith.constant 0 : i32
    %c0_i32_1 = arith.constant 0 : i32
    return %c0_i32, %c0_i32_0 : i32, i32
  }
  func.func @transform_13(%arg0: i32) -> (i32, i32) {
    %c0_i32 = arith.constant 0 : i32
    %c0_i32_0 = arith.constant 0 : i32
    %c0_i32_1 = arith.constant 0 : i32
    return %c0_i32, %c0_i32_0 : i32, i32
  }
  func.func @transform_14(%arg0: i32) -> (i32, i32) {
    %c0_i32 = arith.constant 0 : i32
    %c0_i32_0 = arith.constant 0 : i32
    %c0_i32_1 = arith.constant 0 : i32
    return %c0_i32, %c0_i32_0 : i32, i32
  }
  func.func @transform_15(%arg0: i32) -> (i32, i32) {
    %c0_i32 = arith.constant 0 : i32
    %c0_i32_0 = arith.constant 0 : i32
    return %arg0, %c0_i32 : i32, i32
  }
}

</mosaic_0001>

<llo_original>
// kernel: c_mlp_forward.1
$region0: #{c_mlp_forward.1}
  #allocation0 [shape = 'u32[]', space=smem, size = 0x4, offset = 0x4, fixed_abs, tag = 'smem constant byte address 0x4 - core index']
  #allocation1 [shape = 'u32[72,128]{1,0:T(1,128)}', space=vmem, size = 0x9000, scoped, tag = 'internal scratch']
  %s0 = inlined_call_operand.vmem [shape: bf16[8,48], index: 0, kind: input, shape index: {}]
  %s1 = inlined_call_operand.vmem [shape: bf16[8,4], index: 1, kind: input, shape index: {}]
  %s2 = inlined_call_operand.vmem [shape: bf16[48,256], index: 2, kind: input, shape index: {}]
  %s3 = inlined_call_operand.vmem [shape: bf16[4,256], index: 3, kind: input, shape index: {}]
  %s4 = inlined_call_operand.vmem [shape: f32[1,256], index: 4, kind: input, shape index: {}]
  %s5 = inlined_call_operand.vmem [shape: f32[1,256], index: 5, kind: input, shape index: {}]
  %s6 = inlined_call_operand.vmem [shape: f32[1,256], index: 6, kind: input, shape index: {}]
  %s7 = inlined_call_operand.vmem [shape: bf16[256,128], index: 7, kind: input, shape index: {}]
  %s8 = inlined_call_operand.vmem [shape: f32[1,128], index: 8, kind: input, shape index: {}]
  %s9 = inlined_call_operand.vmem [shape: f32[1,128], index: 9, kind: input, shape index: {}]
  %s10 = inlined_call_operand.vmem [shape: f32[1,128], index: 10, kind: input, shape index: {}]
  %s11 = inlined_call_operand.vmem [shape: bf16[128,32], index: 11, kind: input, shape index: {}]
  %s12 = inlined_call_operand.vmem [shape: f32[1,32], index: 12, kind: input, shape index: {}]
  %s13 = inlined_call_operand.vmem [shape: f32[1,32], index: 13, kind: input, shape index: {}]
  %s14 = inlined_call_operand.vmem [shape: f32[1,32], index: 14, kind: input, shape index: {}]
  %s15 = inlined_call_operand.hbm [shape: f32[8,32], index: 15, kind: output, shape index: {}]
  %s16 = sld [smem:[#allocation0]]
  $region70: #{c_mlp_forward.1} parent=0
    _
  %s18 = ssub.s32 1, %s16
  %s19 = scalar_select 0, %s18, %s16
  $region1: #{c_mlp_forward.1} parent=0
    #allocation2 [shape = 'u8[4096]{0}', space=vmem, size = 0x1000, scoped, tag = 'output window, operand 0, single buffered']
    #allocation3 [shape = 's32[1]{0}', space=sflag, size = 0x4, scoped, tag = 'scoped memory for c_mlp_forward.1']
    %20 = vsyncpa [#allocation3], 0
    // Predicated region
    $region2: #{c_mlp_forward.1} parent=1 // pred_check
      _
    $region3: #{c_mlp_forward.1} parent=1 // pred_check_branch
      %22 = sbr.rel (0) target = $region5
    $region4: #{c_mlp_forward.1} parent=1 // pred_region
      _
    $region5: #{c_mlp_forward.1} parent=1 // pred_fallthru
      _
    // Predicated region
    $region6: #{c_mlp_forward.1} parent=1 // pred_check
      _
    $region7: #{c_mlp_forward.1} parent=1 // pred_check_branch
      %24 = sbr.rel (0) target = $region9
    $region8: #{c_mlp_forward.1} parent=1 // pred_region
      _
    $region9: #{c_mlp_forward.1} parent=1 // pred_fallthru
      _
    // Predicated region
    $region10: #{c_mlp_forward.1} parent=1 // pred_check
      _
    $region11: #{c_mlp_forward.1} parent=1 // pred_check_branch
      %26 = sbr.rel (0) target = $region13
    $region12: #{c_mlp_forward.1} parent=1 // pred_region
      _
    $region13: #{c_mlp_forward.1} parent=1 // pred_fallthru
      _
    // Predicated region
    $region14: #{c_mlp_forward.1} parent=1 // pred_check
      _
    $region15: #{c_mlp_forward.1} parent=1 // pred_check_branch
      %28 = sbr.rel (0) target = $region17
    $region16: #{c_mlp_forward.1} parent=1 // pred_region
      _
    $region17: #{c_mlp_forward.1} parent=1 // pred_fallthru
      _
    // Predicated region
    $region18: #{c_mlp_forward.1} parent=1 // pred_check
      _
    $region19: #{c_mlp_forward.1} parent=1 // pred_check_branch
      %30 = sbr.rel (0) target = $region21
    $region20: #{c_mlp_forward.1} parent=1 // pred_region
      _
    $region21: #{c_mlp_forward.1} parent=1 // pred_fallthru
      _
    // Predicated region
    $region22: #{c_mlp_forward.1} parent=1 // pred_check
      _
    $region23: #{c_mlp_forward.1} parent=1 // pred_check_branch
      %32 = sbr.rel (0) target = $region25
    $region24: #{c_mlp_forward.1} parent=1 // pred_region
      _
    $region25: #{c_mlp_forward.1} parent=1 // pred_fallthru
      _
    // Predicated region
    $region26: #{c_mlp_forward.1} parent=1 // pred_check
      _
    $region27: #{c_mlp_forward.1} parent=1 // pred_check_branch
      %34 = sbr.rel (0) target = $region29
    $region28: #{c_mlp_forward.1} parent=1 // pred_region
      _
    $region29: #{c_mlp_forward.1} parent=1 // pred_fallthru
      _
    // Predicated region
    $region30: #{c_mlp_forward.1} parent=1 // pred_check
      _
    $region31: #{c_mlp_forward.1} parent=1 // pred_check_branch
      %36 = sbr.rel (0) target = $region33
    $region32: #{c_mlp_forward.1} parent=1 // pred_region
      _
    $region33: #{c_mlp_forward.1} parent=1 // pred_fallthru
      _
    // Predicated region
    $region34: #{c_mlp_forward.1} parent=1 // pred_check
      _
    $region35: #{c_mlp_forward.1} parent=1 // pred_check_branch
      %38 = sbr.rel (0) target = $region37
    $region36: #{c_mlp_forward.1} parent=1 // pred_region
      _
    $region37: #{c_mlp_forward.1} parent=1 // pred_fallthru
      _
    // Predicated region
    $region38: #{c_mlp_forward.1} parent=1 // pred_check
      _
    $region39: #{c_mlp_forward.1} parent=1 // pred_check_branch
      %40 = sbr.rel (0) target = $region41
    $region40: #{c_mlp_forward.1} parent=1 // pred_region
      _
    $region41: #{c_mlp_forward.1} parent=1 // pred_fallthru
      _
    // Predicated region
    $region42: #{c_mlp_forward.1} parent=1 // pred_check
      _
    $region43: #{c_mlp_forward.1} parent=1 // pred_check_branch
      %42 = sbr.rel (0) target = $region45
    $region44: #{c_mlp_forward.1} parent=1 // pred_region
      _
    $region45: #{c_mlp_forward.1} parent=1 // pred_fallthru
      _
    // Predicated region
    $region46: #{c_mlp_forward.1} parent=1 // pred_check
      _
    $region47: #{c_mlp_forward.1} parent=1 // pred_check_branch
      %44 = sbr.rel (0) target = $region49
    $region48: #{c_mlp_forward.1} parent=1 // pred_region
      _
    $region49: #{c_mlp_forward.1} parent=1 // pred_fallthru
      _
    // Predicated region
    $region50: #{c_mlp_forward.1} parent=1 // pred_check
      _
    $region51: #{c_mlp_forward.1} parent=1 // pred_check_branch
      %46 = sbr.rel (0) target = $region53
    $region52: #{c_mlp_forward.1} parent=1 // pred_region
      _
    $region53: #{c_mlp_forward.1} parent=1 // pred_fallthru
      _
    // Predicated region
    $region54: #{c_mlp_forward.1} parent=1 // pred_check
      _
    $region55: #{c_mlp_forward.1} parent=1 // pred_check_branch
      %48 = sbr.rel (0) target = $region57
    $region56: #{c_mlp_forward.1} parent=1 // pred_region
      _
    $region57: #{c_mlp_forward.1} parent=1 // pred_fallthru
      _
    // Predicated region
    $region58: #{c_mlp_forward.1} parent=1 // pred_check
      _
    $region59: #{c_mlp_forward.1} parent=1 // pred_check_branch
      %50 = sbr.rel (0) target = $region61
    $region60: #{c_mlp_forward.1} parent=1 // pred_region
      _
    $region61: #{c_mlp_forward.1} parent=1 // pred_fallthru
      _
    %v52 = vld [vmem:[%s4] sm:$0x3]
    %v53 = vld [vmem:[%s5] sm:$0x3]
    %v54 = vld [vmem:[%s6] sm:$0x3]
    %v55 = vld [vmem:[%s8] sm:$0x1]
    %v56 = vld [vmem:[%s9] sm:$0x1]
    %v57 = vld [vmem:[%s10] sm:$0x1]
    %v58 = vld [vmem:[%s12] sm:$0x1]
    %v59 = vld [vmem:[%s13] sm:$0x1]
    %v60 = vld [vmem:[%s14] sm:$0x1]
    %v61 = vld [vmem:[%s0] sm:$0xf]
    %v62 = vld [vmem:[%s2] sm:$0xff]
    %v63 = vld [vmem:[%s2 + $0x8] sm:$0xff]
    %v64 = vld [vmem:[%s2 + $0x10] sm:$0xff]
    %v65 = vld [vmem:[%s2 + $0x18] sm:$0xff]
    %v66 = vld [vmem:[%s2 + $0x20] sm:$0xff]
    %v67 = vld [vmem:[%s2 + $0x28] sm:$0xff]
    %v68 = vld [vmem:[%s1] sm:$0xf]
    %v69 = vld [vmem:[%s3] sm:$0xf]
    %71 = vst [vmem:[#allocation1] ss:$4 sm:$0xff] %v69
    %v72 = vld.sshfl [vmem:[#allocation1] sm:$0xff pattern:$0x73625140]
    %v73 = vld.sshfl [vmem:[#allocation1 + $0x8] sm:$0xff pattern:$0x73625140]
    %vm74 = vcmask 31744
    %v76 = vsel %vm74, %v68, 0
    %vm78 = vcmask 1041408
    %v79 = vsel %vm78, %v72, 0
    %v81 = vsel %vm78, %v73, 0
    %83 = vmatpush.bf16.msra.mxu0 0
    %84 = vmatpush.bf16.msra.mxu0 0
    %85 = vmatpush.bf16.msra.mxu0 0
    %86 = vmatpush.bf16.msra.mxu0 0
    %87 = vmatpush.bf16.msra.mxu0 0
    %88 = vmatpush.bf16.msra.mxu0 0
    %89 = vmatpush.bf16.msra.mxu0 0
    %90 = vmatpush.bf16.msra.mxu0 %v79
    %91 = vmatmul.bf16.gmra.mxu0 %v76
    %v92 = vpop.f32.mrf.mxu0
    %v93 = vadd.f32 0.0, %v92
    %v94 = vpop.f32.mrf.mxu0
    %95 = vdwg.mxu0
    %96 = vmatpush.bf16.msra.mxu0 0
    %97 = vmatpush.bf16.msra.mxu0 0
    %98 = vmatpush.bf16.msra.mxu0 0
    %99 = vmatpush.bf16.msra.mxu0 0
    %100 = vmatpush.bf16.msra.mxu0 0
    %101 = vmatpush.bf16.msra.mxu0 0
    %102 = vmatpush.bf16.msra.mxu0 0
    %103 = vmatpush.bf16.msra.mxu0 %v81
    %104 = vmatmul.bf16.gmra.mxu0 %v76
    %v105 = vpop.f32.mrf.mxu0
    %v106 = vadd.f32 0.0, %v105
    %v107 = vpop.f32.mrf.mxu0
    %108 = vdwg.mxu0
    %v115 = vunpack.c.l.b16 %v62
    %v116 = vunpack.c.h.b16 %v62
    %v117 = vunpack.c.l.b16 %v63
    %v118 = vunpack.c.h.b16 %v63
    %v119 = vunpack.c.l.b16 %v64
    %v120 = vunpack.c.h.b16 %v64
    %v121 = vunpack.c.l.b16 %v65
    %v122 = vunpack.c.h.b16 %v65
    %v123 = vunpack.c.l.b16 %v66
    %v124 = vunpack.c.h.b16 %v66
    %v125 = vunpack.c.l.b16 %v67
    %v126 = vunpack.c.h.b16 %v67
    %v127 = vpack.c.b16 %v117, %v115
    %v128 = vpack.c.b16 %v118, %v116
    %v129 = vpack.c.b16 %v121, %v119
    %v130 = vpack.c.b16 %v122, %v120
    %v131 = vpack.c.b16 %v125, %v123
    %v132 = vpack.c.b16 %v126, %v124
    %vm139 = vcmask 392192
    %v141 = vsel %vm139, %v61, 0
    %143 = vmatpush.bf16.msra.mxu0 0
    %144 = vmatpush.bf16.msra.mxu0 0
    %145 = vmatpush.bf16.msra.mxu0 0
    %146 = vmatpush.bf16.msra.mxu0 0
    %147 = vmatpush.bf16.msra.mxu0 0
    %148 = vmatpush.bf16.msra.mxu0 %v131
    %149 = vmatpush.bf16.msra.mxu0 %v129
    %150 = vmatpush.bf16.msra.mxu0 %v127
    %151 = vmatmul.bf16.gmra.mxu0 %v141
    %v152 = vpop.f32.mrf.mxu0
    %v153 = vadd.f32 %v93, %v152
    %v154 = vpop.f32.mrf.mxu0
    %155 = vdwg.mxu0
    %156 = vmatpush.bf16.msra.mxu0 0
    %157 = vmatpush.bf16.msra.mxu0 0
    %158 = vmatpush.bf16.msra.mxu0 0
    %159 = vmatpush.bf16.msra.mxu0 0
    %160 = vmatpush.bf16.msra.mxu0 0
    %161 = vmatpush.bf16.msra.mxu0 %v132
    %162 = vmatpush.bf16.msra.mxu0 %v130
    %163 = vmatpush.bf16.msra.mxu0 %v128
    %164 = vmatmul.bf16.gmra.mxu0 %v141
    %v165 = vpop.f32.mrf.mxu0
    %v166 = vadd.f32 %v106, %v165
    %v167 = vpop.f32.mrf.mxu0
    %168 = vdwg.mxu0
    %v170 = vperm.slane %v52, 0
    %v171 = vperm.slane %v52, 1
    %v174 = vadd.f32 %v153, %v170
    %v175 = vadd.f32 %v166, %v171
    %v176 = vmax.f32 %v174, 0.0
    %v177 = vmax.f32 %v175, 0.0
    %v178 = vadd.f32 %v176, %v177
    %179 = vadd.xlane.f32.xlu0 %v178
    %v180 = vpop.xlane.xlu0 %179
    %v181 = vmul.f32 %v176, %v176
    %v182 = vmul.f32 %v177, %v177
    %v183 = vadd.f32 %v181, %v182
    %184 = vadd.xlane.f32.xlu0 %v183
    %v185 = vpop.xlane.xlu0 %184
    %v186 = vmul.f32 %v180, 0.00390625
    %v187 = vmul.f32 %v185, 0.00390625
    %v188 = vmul.f32 %v186, %v186
    %v189 = vsub.f32 %v187, %v188
    %v190 = vmax.f32 %v189, 0.0
    %v191 = vadd.f32 %v190, 1e-05
    %v192 = vrsqrt.pop %v191
    %v193 = vmul.f32 %v192, %v191
    %v194 = vmul.f32 %v193, %v192
    %v195 = vmul.f32 0.5, %v194
    %v196 = vsub.f32 1.5, %v195
    %v197 = vmul.f32 %v192, %v196
    %vm198 = vweird.f32 %v191
    %vm199 = vweird.f32 %v192
    %vm200 = vmor %vm198, %vm199
    %v201 = vsel %vm200, %v192, %v197
    %v202 = vsub.f32 %v176, %v186
    %v203 = vsub.f32 %v177, %v186
    %v204 = vmul.f32 %v202, %v201
    %v205 = vmul.f32 %v203, %v201
    %v207 = vperm.slane %v53, 0
    %v208 = vperm.slane %v53, 1
    %v211 = vmul.f32 %v204, %v207
    %v212 = vmul.f32 %v205, %v208
    %v214 = vperm.slane %v54, 0
    %v215 = vperm.slane %v54, 1
    %v218 = vadd.f32 %v211, %v214
    %v219 = vadd.f32 %v212, %v215
    %v220 = vpack.c.bf16 %v218, %v218
    %v221 = vpack.c.bf16 %v219, %v219
    %v222 = vld [vmem:[%s7] sm:$0xf]
    %v223 = vld [vmem:[%s7 + $0x4] sm:$0xf]
    %v224 = vld [vmem:[%s7 + $0x8] sm:$0xf]
    %v225 = vld [vmem:[%s7 + $0xc] sm:$0xf]
    %v226 = vld [vmem:[%s7 + $0x10] sm:$0xf]
    %v227 = vld [vmem:[%s7 + $0x14] sm:$0xf]
    %v228 = vld [vmem:[%s7 + $0x18] sm:$0xf]
    %v229 = vld [vmem:[%s7 + $0x1c] sm:$0xf]
    %v230 = vld [vmem:[%s7 + $0x20] sm:$0xf]
    %v231 = vld [vmem:[%s7 + $0x24] sm:$0xf]
    %v232 = vld [vmem:[%s7 + $0x28] sm:$0xf]
    %v233 = vld [vmem:[%s7 + $0x2c] sm:$0xf]
    %v234 = vld [vmem:[%s7 + $0x30] sm:$0xf]
    %v235 = vld [vmem:[%s7 + $0x34] sm:$0xf]
    %v236 = vld [vmem:[%s7 + $0x38] sm:$0xf]
    %v237 = vld [vmem:[%s7 + $0x3c] sm:$0xf]
    %v238 = vld [vmem:[%s7 + $0x40] sm:$0xf]
    %v239 = vld [vmem:[%s7 + $0x44] sm:$0xf]
    %v240 = vld [vmem:[%s7 + $0x48] sm:$0xf]
    %v241 = vld [vmem:[%s7 + $0x4c] sm:$0xf]
    %v242 = vld [vmem:[%s7 + $0x50] sm:$0xf]
    %v243 = vld [vmem:[%s7 + $0x54] sm:$0xf]
    %v244 = vld [vmem:[%s7 + $0x58] sm:$0xf]
    %v245 = vld [vmem:[%s7 + $0x5c] sm:$0xf]
    %v246 = vld [vmem:[%s7 + $0x60] sm:$0xf]
    %v247 = vld [vmem:[%s7 + $0x64] sm:$0xf]
    %v248 = vld [vmem:[%s7 + $0x68] sm:$0xf]
    %v249 = vld [vmem:[%s7 + $0x6c] sm:$0xf]
    %v250 = vld [vmem:[%s7 + $0x70] sm:$0xf]
    %v251 = vld [vmem:[%s7 + $0x74] sm:$0xf]
    %v252 = vld [vmem:[%s7 + $0x78] sm:$0xf]
    %v253 = vld [vmem:[%s7 + $0x7c] sm:$0xf]
    %v255 = vperm.slane %v55, 0
    %v289 = vunpack.c.l.b16 %v222
    %v290 = vunpack.c.l.b16 %v223
    %v291 = vunpack.c.l.b16 %v224
    %v292 = vunpack.c.l.b16 %v225
    %v293 = vunpack.c.l.b16 %v226
    %v294 = vunpack.c.l.b16 %v227
    %v295 = vunpack.c.l.b16 %v228
    %v296 = vunpack.c.l.b16 %v229
    %v297 = vunpack.c.l.b16 %v230
    %v298 = vunpack.c.l.b16 %v231
    %v299 = vunpack.c.l.b16 %v232
    %v300 = vunpack.c.l.b16 %v233
    %v301 = vunpack.c.l.b16 %v234
    %v302 = vunpack.c.l.b16 %v235
    %v303 = vunpack.c.l.b16 %v236
    %v304 = vunpack.c.l.b16 %v237
    %v305 = vunpack.c.l.b16 %v238
    %v306 = vunpack.c.l.b16 %v239
    %v307 = vunpack.c.l.b16 %v240
    %v308 = vunpack.c.l.b16 %v241
    %v309 = vunpack.c.l.b16 %v242
    %v310 = vunpack.c.l.b16 %v243
    %v311 = vunpack.c.l.b16 %v244
    %v312 = vunpack.c.l.b16 %v245
    %v313 = vunpack.c.l.b16 %v246
    %v314 = vunpack.c.l.b16 %v247
    %v315 = vunpack.c.l.b16 %v248
    %v316 = vunpack.c.l.b16 %v249
    %v317 = vunpack.c.l.b16 %v250
    %v318 = vunpack.c.l.b16 %v251
    %v319 = vunpack.c.l.b16 %v252
    %v320 = vunpack.c.l.b16 %v253
    %v321 = vpack.c.b16 %v290, %v289
    %v322 = vpack.c.b16 %v292, %v291
    %v323 = vpack.c.b16 %v294, %v293
    %v324 = vpack.c.b16 %v296, %v295
    %v325 = vpack.c.b16 %v298, %v297
    %v326 = vpack.c.b16 %v300, %v299
    %v327 = vpack.c.b16 %v302, %v301
    %v328 = vpack.c.b16 %v304, %v303
    %v329 = vpack.c.b16 %v306, %v305
    %v330 = vpack.c.b16 %v308, %v307
    %v331 = vpack.c.b16 %v310, %v309
    %v332 = vpack.c.b16 %v312, %v311
    %v333 = vpack.c.b16 %v314, %v313
    %v334 = vpack.c.b16 %v316, %v315
    %v335 = vpack.c.b16 %v318, %v317
    %v336 = vpack.c.b16 %v320, %v319
    %353 = vmatpush.bf16.msra.mxu0 %v328
    %354 = vmatpush.bf16.msra.mxu0 %v327
    %355 = vmatpush.bf16.msra.mxu0 %v326
    %356 = vmatpush.bf16.msra.mxu0 %v325
    %357 = vmatpush.bf16.msra.mxu0 %v324
    %358 = vmatpush.bf16.msra.mxu0 %v323
    %359 = vmatpush.bf16.msra.mxu0 %v322
    %360 = vmatpush.bf16.msra.mxu0 %v321
    %361 = vmatmul.bf16.gmra.mxu0 %v220
    %v362 = vpop.f32.mrf.mxu0
    %v363 = vadd.f32 %v255, %v362
    %v364 = vpop.f32.mrf.mxu0
    %365 = vdwg.mxu0
    %366 = vmatpush.bf16.msra.mxu0 %v336
    %367 = vmatpush.bf16.msra.mxu0 %v335
    %368 = vmatpush.bf16.msra.mxu0 %v334
    %369 = vmatpush.bf16.msra.mxu0 %v333
    %370 = vmatpush.bf16.msra.mxu0 %v332
    %371 = vmatpush.bf16.msra.mxu0 %v331
    %372 = vmatpush.bf16.msra.mxu0 %v330
    %373 = vmatpush.bf16.msra.mxu0 %v329
    %374 = vmatmul.bf16.gmra.mxu0 %v221
    %v375 = vpop.f32.mrf.mxu0
    %v376 = vadd.f32 %v363, %v375
    %v377 = vpop.f32.mrf.mxu0
    %378 = vdwg.mxu0
    %v379 = vmax.f32 %v376, 0.0
    %380 = vadd.xlane.f32.xlu0 %v379
    %v381 = vpop.xlane.xlu0 %380
    %v382 = vmul.f32 %v379, %v379
    %383 = vadd.xlane.f32.xlu0 %v382
    %v384 = vpop.xlane.xlu0 %383
    %v385 = vmul.f32 %v381, 0.0078125
    %v386 = vmul.f32 %v384, 0.0078125
    %v387 = vmul.f32 %v385, %v385
    %v388 = vsub.f32 %v386, %v387
    %v389 = vmax.f32 %v388, 0.0
    %v390 = vadd.f32 %v389, 1e-05
    %v391 = vrsqrt.pop %v390
    %v392 = vmul.f32 %v391, %v390
    %v393 = vmul.f32 %v392, %v391
    %v394 = vmul.f32 0.5, %v393
    %v395 = vsub.f32 1.5, %v394
    %v396 = vmul.f32 %v391, %v395
    %vm397 = vweird.f32 %v390
    %vm398 = vweird.f32 %v391
    %vm399 = vmor %vm397, %vm398
    %v400 = vsel %vm399, %v391, %v396
    %v401 = vsub.f32 %v379, %v385
    %v402 = vmul.f32 %v401, %v400
    %v404 = vperm.slane %v56, 0
    %v406 = vmul.f32 %v402, %v404
    %v408 = vperm.slane %v57, 0
    %v410 = vadd.f32 %v406, %v408
    %v411 = vpack.c.bf16 %v410, %v410
    %v412 = vld [vmem:[%s11] sm:$0xf]
    %v413 = vld [vmem:[%s11 + $0x4] sm:$0xf]
    %v414 = vld [vmem:[%s11 + $0x8] sm:$0xf]
    %v415 = vld [vmem:[%s11 + $0xc] sm:$0xf]
    %v416 = vld [vmem:[%s11 + $0x10] sm:$0xf]
    %v417 = vld [vmem:[%s11 + $0x14] sm:$0xf]
    %v418 = vld [vmem:[%s11 + $0x18] sm:$0xf]
    %v419 = vld [vmem:[%s11 + $0x1c] sm:$0xf]
    %v420 = vld [vmem:[%s11 + $0x20] sm:$0xf]
    %v421 = vld [vmem:[%s11 + $0x24] sm:$0xf]
    %v422 = vld [vmem:[%s11 + $0x28] sm:$0xf]
    %v423 = vld [vmem:[%s11 + $0x2c] sm:$0xf]
    %v424 = vld [vmem:[%s11 + $0x30] sm:$0xf]
    %v425 = vld [vmem:[%s11 + $0x34] sm:$0xf]
    %v426 = vld [vmem:[%s11 + $0x38] sm:$0xf]
    %v427 = vld [vmem:[%s11 + $0x3c] sm:$0xf]
    %v429 = vperm.slane %v58, 0
    %v447 = vunpack.c.l.b16 %v412
    %v448 = vunpack.c.l.b16 %v413
    %v449 = vunpack.c.l.b16 %v414
    %v450 = vunpack.c.l.b16 %v415
    %v451 = vunpack.c.l.b16 %v416
    %v452 = vunpack.c.l.b16 %v417
    %v453 = vunpack.c.l.b16 %v418
    %v454 = vunpack.c.l.b16 %v419
    %v455 = vunpack.c.l.b16 %v420
    %v456 = vunpack.c.l.b16 %v421
    %v457 = vunpack.c.l.b16 %v422
    %v458 = vunpack.c.l.b16 %v423
    %v459 = vunpack.c.l.b16 %v424
    %v460 = vunpack.c.l.b16 %v425
    %v461 = vunpack.c.l.b16 %v426
    %v462 = vunpack.c.l.b16 %v427
    %v463 = vpack.c.b16 %v448, %v447
    %v464 = vpack.c.b16 %v450, %v449
    %v465 = vpack.c.b16 %v452, %v451
    %v466 = vpack.c.b16 %v454, %v453
    %v467 = vpack.c.b16 %v456, %v455
    %v468 = vpack.c.b16 %v458, %v457
    %v469 = vpack.c.b16 %v460, %v459
    %v470 = vpack.c.b16 %v462, %v461
    %479 = vmatpush.bf16.msra.mxu0 %v470
    %480 = vmatpush.bf16.msra.mxu0 %v469
    %481 = vmatpush.bf16.msra.mxu0 %v468
    %482 = vmatpush.bf16.msra.mxu0 %v467
    %483 = vmatpush.bf16.msra.mxu0 %v466
    %484 = vmatpush.bf16.msra.mxu0 %v465
    %485 = vmatpush.bf16.msra.mxu0 %v464
    %486 = vmatpush.bf16.msra.mxu0 %v463
    %487 = vmatmul.bf16.gmra.mxu0 %v411
    %v488 = vpop.f32.mrf.mxu0
    %v489 = vadd.f32 %v429, %v488
    %v490 = vpop.f32.mrf.mxu0
    %491 = vdwg.mxu0
    %v492 = vmax.f32 %v489, 0.0
    %vm493 = vcmask 261120
    %v494 = vsel %vm493, %v492, 0.0
    %495 = vadd.xlane.f32.xlu0 %v494
    %v496 = vpop.xlane.xlu0 %495
    %v497 = vmul.f32 %v492, %v492
    %v498 = vsel %vm493, %v497, 0.0
    %499 = vadd.xlane.f32.xlu0 %v498
    %v500 = vpop.xlane.xlu0 %499
    %v501 = vmul.f32 %v496, 0.03125
    %v502 = vmul.f32 %v500, 0.03125
    %v503 = vmul.f32 %v501, %v501
    %v504 = vsub.f32 %v502, %v503
    %v505 = vmax.f32 %v504, 0.0
    %v506 = vadd.f32 %v505, 1e-05
    %v507 = vrsqrt.pop %v506
    %v508 = vmul.f32 %v507, %v506
    %v509 = vmul.f32 %v508, %v507
    %v510 = vmul.f32 0.5, %v509
    %v511 = vsub.f32 1.5, %v510
    %v512 = vmul.f32 %v507, %v511
    %vm513 = vweird.f32 %v506
    %vm514 = vweird.f32 %v507
    %vm515 = vmor %vm513, %vm514
    %v516 = vsel %vm515, %v507, %v512
    %v517 = vsub.f32 %v492, %v501
    %v518 = vmul.f32 %v517, %v516
    %v520 = vperm.slane %v59, 0
    %v522 = vmul.f32 %v518, %v520
    %v524 = vperm.slane %v60, 0
    %v526 = vadd.f32 %v522, %v524
    %527 = vst.msk [vmem:[#allocation2] sm:$0xff] %vm493, %v526
    // Predicated region
    $region62: #{c_mlp_forward.1} parent=1 // pred_check
      _
    $region63: #{c_mlp_forward.1} parent=1 // pred_check_branch
      %529 = sbr.rel (0) target = $region65
    $region64: #{c_mlp_forward.1} parent=1 // pred_region
      %531 = vsyncadd [#allocation3], 0
      %s533 = sshll.u32 [#allocation2], 4
      %s534 = int_to_ptr.vmem [resolvable:$true] %s533
      %s535 = sshll.u32 %s15, 4
      %s536 = int_to_ptr.hbm [resolvable:$true] %s535
      %538 = dma.vmem_to_hbm [thread:$0]  %s534, 128, %s536, [#allocation3]
    $region65: #{c_mlp_forward.1} parent=1 // pred_fallthru
      _
    // Predicated region
    $region66: #{c_mlp_forward.1} parent=1 // pred_check
      _
    $region67: #{c_mlp_forward.1} parent=1 // pred_check_branch
      %540 = sbr.rel (0) target = $region69
    $region68: #{c_mlp_forward.1} parent=1 // pred_region
      %542 = dma.done [#allocation3], 128
    $region69: #{c_mlp_forward.1} parent=1 // pred_fallthru
      _
    %543 = vsyncpa [#allocation3], 1

</llo_original>
